<compile_context>
chip_gen: v7x
topology: tpu7x:2x2x1
jax: 0.10.0
libtpu: 0.0.40
codegen_flags: <defaults>
</compile_context>

<pallas_src>
import math
import jax
import jax.numpy as jnp
from jax.experimental import pallas as pl
from jax.experimental.pallas import tpu as pltpu


# ---------------------------------------------------------------------------
# Pallas kernel: VPU add + f32 SiLU (EUP) + one bf16 MXU matmul (f32 acc).
# ---------------------------------------------------------------------------
def mlp_kernel(e1_ref, e2_ref, w23_ref, out_ref):
    h = e1_ref[...] + e2_ref[...]                       # (TB, Hn) f32
    h = h * jax.nn.sigmoid(h)                           # SiLU in f32
    out_ref[...] = jnp.dot(h.astype(jnp.bfloat16),      # bf16 MXU inputs
                           w23_ref[...],                # (Hn, TN) bf16
                           preferred_element_type=jnp.float32)


def _round_up(x, m):
    return ((x + m - 1) // m) * m


def mlp_pallas(e1, e2, w23_p):
    """e1,e2: (B, Hn) f32 gathered+W1-folded activations; w23_p: (Hn, Vp) bf16."""
    B, Hn = e1.shape
    Vp = w23_p.shape[1]

    # Batch tile: as large as possible (per-grid-step overhead ~0.35us), capped
    # at 512 so activation/output tiles stay comfortably inside VMEM everywhere.
    TB = min(512, _round_up(B, 8))
    Bp = _round_up(B, TB)
    if Bp != B:
        e1 = jnp.pad(e1, ((0, Bp - B), (0, 0)))
        e2 = jnp.pad(e2, ((0, Bp - B), (0, 0)))

    # Vocab (output-N) tile: multiple of 256 fills the v6e/v7x 2x256 MXU when
    # the padded vocab allows; 128 otherwise (optimal on v5e's 4x128 MXU).
    if Vp % 512 == 0:
        TN = 512
    elif Vp % 256 == 0:
        TN = 256
    else:
        TN = 128
    TN = min(TN, Vp)

    grid = (Bp // TB, Vp // TN)

    cost = pl.CostEstimate(
        flops=2 * Bp * Hn * Vp,
        transcendentals=Bp * Hn,
        bytes_accessed=2 * (4 * Bp * Hn) + 2 * Hn * Vp + 4 * Bp * Vp,
    )

    out = pl.pallas_call(
        mlp_kernel,
        out_shape=jax.ShapeDtypeStruct((Bp, Vp), jnp.float32),
        grid_spec=pltpu.PrefetchScalarGridSpec(
            num_scalar_prefetch=0,
            grid=grid,
            in_specs=[
                pl.BlockSpec((TB, Hn), lambda i, j: (i, 0)),   # e1 tile (batch-tiled)
                pl.BlockSpec((TB, Hn), lambda i, j: (i, 0)),   # e2 tile (batch-tiled)
                pl.BlockSpec((Hn, TN), lambda i, j: (0, j)),   # w23 streamed over vocab
            ],
            out_specs=pl.BlockSpec((TB, TN), lambda i, j: (i, j)),
        ),
        compiler_params=pltpu.CompilerParams(
            dimension_semantics=("parallel", "parallel"),
            # 48 MiB: above the v5e/v6e scoped default, still leaves headroom on
            # v7x's 64 MiB physical VMEM for the pipeline's double buffers.
            vmem_limit_bytes=48 * 1024 * 1024,
        ),
        cost_estimate=cost,
    )(e1, e2, w23_p)

    return out[:B] if Bp != B else out


# ---------------------------------------------------------------------------
# One-time weight preparation (hoisted out of the forward path).
# ---------------------------------------------------------------------------
def prepare_weights(embedding, w1, w2, w3):
    n_blocks, _, H = w1.shape
    vocab = w3.shape[0]

    # Fold W1 into the embedding table (f32):
    #   emb_h[v, n*H + h] = sum_j embedding[v, 2n + j] * w1[n, j, h]
    emb_blk = embedding.reshape(vocab, n_blocks, 2)
    emb_h = jnp.einsum('vnj,njh->vnh', emb_blk, w1).reshape(vocab, n_blocks * H)

    # Fold W2 and W3:  w23[n*H + h, v] = sum_j w2[n, h, j] * w3[v, 2n + j]
    w3_blk = w3.reshape(vocab, n_blocks, 2)
    w23 = jnp.einsum('nhj,vnj->nhv', w2, w3_blk).reshape(n_blocks * H, vocab)

    # Pad vocab to a lane-dense multiple of 128 (zero columns) and cast to bf16
    # once — the MXU's native input type on v5e/v6e/v7x.
    vocab_pad = _round_up(vocab, 128)
    w23_p = (jnp.zeros((n_blocks * H, vocab_pad), jnp.float32)
             .at[:, :vocab].set(w23)
             .astype(jnp.bfloat16))
    return emb_h, w23_p


# ---------------------------------------------------------------------------
# Parameter construction (deterministic, mirrors the PyTorch __init__)
# ---------------------------------------------------------------------------
def make_circle_embeddings(key, embed_dim, vocab_size):
    n_blocks = embed_dim // 2
    k_values = jax.random.randint(key, (n_blocks,), 1, vocab_size).astype(jnp.float32)
    arange = jnp.arange(vocab_size - 1, dtype=jnp.float32)
    div = 2.0 * jnp.pi * arange / (vocab_size - 1)
    angles = k_values[:, None] * div[None, :]                      # (n_blocks, vocab-1)
    zeros = jnp.zeros((n_blocks, 1), jnp.float32)
    cos = jnp.concatenate([jnp.cos(angles), zeros], axis=1)        # (n_blocks, vocab)
    sin = jnp.concatenate([jnp.sin(angles), zeros], axis=1)        # (n_blocks, vocab)
    emb = jnp.stack([cos, sin], axis=2)                            # (n_blocks, vocab, 2)
    emb = jnp.transpose(emb, (1, 0, 2)).reshape(vocab_size, embed_dim)
    return emb * 0.7


def init_params(key, embed_dim, vocab_size, hidden_dim):
    n_blocks = embed_dim // 2
    k_emb, k_w1, k_w2, k_w3 = jax.random.split(key, 4)
    embedding = make_circle_embeddings(k_emb, embed_dim, vocab_size)
    linear1_weights = jax.random.normal(k_w1, (n_blocks, 2, hidden_dim), jnp.float32)
    linear2_weights = jax.random.normal(k_w2, (n_blocks, hidden_dim, 2), jnp.float32)
    # nn.Linear(embed_dim, vocab_size, bias=False): weight (vocab, embed_dim),
    # kaiming-uniform -> U(-1/sqrt(embed_dim), 1/sqrt(embed_dim))
    bound = 1.0 / math.sqrt(embed_dim)
    linear3_weight = jax.random.uniform(
        k_w3, (vocab_size, embed_dim), jnp.float32, minval=-bound, maxval=bound)
    return embedding, linear1_weights, linear2_weights, linear3_weight


# ---------------------------------------------------------------------------
# Forward wrapper: gather of the W1-folded table is XLA glue; everything else
# (add, SiLU, matmul) runs inside the Pallas kernel.  Output keeps the padded
# vocab dimension for downstream consumers (slice only where needed).
# ---------------------------------------------------------------------------
def mlp_forward(x1, x2, emb_h, w23_p):
    e1 = emb_h[x1]                                                 # (B, n_blocks*H) f32
    e2 = emb_h[x2]
    return mlp_pallas(e1, e2, w23_p)                               # (B, vocab_pad) f32


def mlp_reference(x1, x2, embedding, w1, w2, w3):
    """Pure-JAX f32 reference matching the PyTorch op order exactly."""
    n_blocks = w1.shape[0]
    e1 = embedding[x1].reshape(-1, n_blocks, 2)
    e2 = embedding[x2].reshape(-1, n_blocks, 2)
    h = jnp.einsum('bnj,njk->bnk', e1, w1) + jnp.einsum('bnj,njk->bnk', e2, w1)
    h = h * jax.nn.sigmoid(h)
    y = jnp.einsum('bnk,nkj->bnj', h, w2).reshape(h.shape[0], -1)
    return y @ w3.T


if __name__ == "__main__":
    embed_dim, vocab_size, hidden_dim = 8, 16, 32
    batch = 8

    key = jax.random.PRNGKey(0)
    k_params, k_x1, k_x2 = jax.random.split(key, 3)
    embedding, w1, w2, w3 = init_params(k_params, embed_dim, vocab_size, hidden_dim)

    # One-time weight fusion (W1 folded into the embedding, W2*W3 folded,
    # lane-dense vocab padding, bf16 cast of the MXU weight).
    emb_h, w23_p = prepare_weights(embedding, w1, w2, w3)

    x1 = jax.random.randint(k_x1, (batch,), 0, vocab_size, dtype=jnp.int32)
    x2 = jax.random.randint(k_x2, (batch,), 0, vocab_size, dtype=jnp.int32)

    out = mlp_forward(x1, x2, emb_h, w23_p)
    out = jax.block_until_ready(out)

    ref = mlp_reference(x1, x2, embedding, w1, w2, w3)
    out_v = out[:, :vocab_size]                                    # slice padded vocab
    assert out_v.shape == (batch, vocab_size)
    # bf16 MXU inputs -> tolerance loosened relative to the pure-f32 reference.
    rel_err = jnp.max(jnp.abs(out_v - ref)) / (jnp.max(jnp.abs(ref)) + 1e-6)
    assert rel_err < 5e-2, f"mismatch vs reference: rel_err={rel_err}"

    print("KERNEL_OK")
</pallas_src>

<mosaic_0001>
module attributes {stable_mosaic.version = 11 : i64} {
  func.func @mlp_kernel(%arg0: i32, %arg1: i32, %arg2: memref<8x128xf32, #tpu.memory_space<vmem>>, %arg3: memref<8x128xf32, #tpu.memory_space<vmem>>, %arg4: memref<128x128xbf16, #tpu.memory_space<vmem>>, %arg5: memref<8x128xf32, #tpu.memory_space<vmem>>) attributes {dimension_semantics = [#tpu.dimension_semantics<parallel>, #tpu.dimension_semantics<parallel>], iteration_bounds = array<i64: 1, 1>, scalar_prefetch = 0 : i64, scratch_operands = 0 : i64, tpu.core_type = #tpu.core_type<tc>, window_params = [{transform_indices = @transform_0, window_bounds = array<i64: 8, 128>}, {transform_indices = @transform_1, window_bounds = array<i64: 8, 128>}, {transform_indices = @transform_2, window_bounds = array<i64: 128, 128>}, {transform_indices = @transform_3, window_bounds = array<i64: 8, 128>}]} {
    %c0 = arith.constant 0 : index
    %c0_0 = arith.constant 0 : index
    %0 = vector.load %arg2[%c0, %c0_0] : memref<8x128xf32, #tpu.memory_space<vmem>>, vector<8x128xf32>
    %c0_1 = arith.constant 0 : index
    %c0_2 = arith.constant 0 : index
    %1 = vector.load %arg3[%c0_1, %c0_2] : memref<8x128xf32, #tpu.memory_space<vmem>>, vector<8x128xf32>
    %2 = arith.addf %0, %1 : vector<8x128xf32>
    %3 = arith.negf %2 : vector<8x128xf32>
    %4 = math.exp %3 : vector<8x128xf32>
    %cst = arith.constant 1.000000e+00 : f32
    %5 = vector.broadcast %cst : f32 to vector<8x128xf32>
    %6 = arith.addf %5, %4 : vector<8x128xf32>
    %7 = arith.divf %5, %6 : vector<8x128xf32>
    %8 = arith.mulf %2, %7 : vector<8x128xf32>
    %9 = arith.truncf %8 : vector<8x128xf32> to vector<8x128xbf16>
    %c0_3 = arith.constant 0 : index
    %c0_4 = arith.constant 0 : index
    %10 = vector.load %arg4[%c0_3, %c0_4] : memref<128x128xbf16, #tpu.memory_space<vmem>>, vector<128x128xbf16>
    %cst_5 = arith.constant dense<0.000000e+00> : vector<8x128xf32>
    %11 = tpu.matmul %9, %10, %cst_5 {dimension_numbers = #tpu.dot_dimension_numbers<[1], [0], [0], [1], [0, 0, 1, 1], [], []>} : vector<8x128xbf16>, vector<128x128xbf16>, vector<8x128xf32> -> vector<8x128xf32>
    %c0_6 = arith.constant 0 : index
    %c0_7 = arith.constant 0 : index
    %12 = vector.load %arg5[%c0_6, %c0_7] : memref<8x128xf32, #tpu.memory_space<vmem>>, vector<8x128xf32>
    tpu.vector_store %arg5[%c0_6, %c0_7], %11 {strides = array<i32>} : memref<8x128xf32, #tpu.memory_space<vmem>>, vector<8x128xf32>,
    return
  }
  func.func @transform_0(%arg0: i32, %arg1: i32) -> (i32, i32) {
    %c0_i32 = arith.constant 0 : i32
    %c0_i32_0 = arith.constant 0 : i32
    return %arg0, %c0_i32 : i32, i32
  }
  func.func @transform_1(%arg0: i32, %arg1: i32) -> (i32, i32) {
    %c0_i32 = arith.constant 0 : i32
    %c0_i32_0 = arith.constant 0 : i32
    return %arg0, %c0_i32 : i32, i32
  }
  func.func @transform_2(%arg0: i32, %arg1: i32) -> (i32, i32) {
    %c0_i32 = arith.constant 0 : i32
    %c0_i32_0 = arith.constant 0 : i32
    return %c0_i32, %arg1 : i32, i32
  }
  func.func @transform_3(%arg0: i32, %arg1: i32) -> (i32, i32) {
    %c0_i32 = arith.constant 0 : i32
    return %arg0, %arg1 : i32, i32
  }
}

</mosaic_0001>

<llo_original>
// kernel: tpu_custom_call.1
$region0: #{tpu_custom_call.1}
  #allocation0 [shape = 'u32[]', space=smem, size = 0x4, offset = 0x4, fixed_abs, tag = 'smem constant byte address 0x4 - core index']
  #allocation1 [shape = 'u32[144,128]{1,0:T(1,128)}', space=vmem, size = 0x12000, scoped, tag = 'internal scratch']
  %s0 = inlined_call_operand.hbm [shape: f32[8,128], index: 0, kind: input, shape index: {}]
  %s1 = inlined_call_operand.hbm [shape: f32[8,128], index: 1, kind: input, shape index: {}]
  %s2 = inlined_call_operand.hbm [shape: bf16[128,128], index: 2, kind: input, shape index: {}]
  %s3 = inlined_call_operand.hbm [shape: f32[8,128], index: 3, kind: output, shape index: {}]
  %s4 = sld [smem:[#allocation0]]
  $region34: #{tpu_custom_call.1} parent=0
    _
  %s6 = ssub.s32 1, %s4
  %s7 = scalar_select 0, %s6, %s4
  $region1: #{tpu_custom_call.1} parent=0
    #allocation2 [shape = 'u8[4096]{0}', space=vmem, size = 0x1000, scoped, tag = 'input window, operand 0, single buffered']
    #allocation3 [shape = 's32[1]{0}', space=sflag, size = 0x4, scoped, tag = 'scoped memory for tpu_custom_call.1']
    #allocation4 [shape = 's32[1]{0}', space=sflag, size = 0x4, scoped, tag = 'scoped memory for tpu_custom_call.1']
    #allocation5 [shape = 'u8[4096]{0}', space=vmem, size = 0x1000, scoped, tag = 'input window, operand 1, single buffered']
    #allocation6 [shape = 's32[1]{0}', space=sflag, size = 0x4, scoped, tag = 'scoped memory for tpu_custom_call.1']
    #allocation7 [shape = 'u8[32768]{0}', space=vmem, size = 0x8000, scoped, tag = 'input window, operand 2, single buffered']
    #allocation8 [shape = 'u8[4096]{0}', space=vmem, size = 0x1000, scoped, tag = 'output window, operand 0, single buffered']
    %8 = vsyncpa [#allocation3], 0
    %9 = vsyncpa [#allocation6], 0
    %10 = vsyncpa [#allocation4], 0
    // Predicated region
    $region2: #{tpu_custom_call.1} parent=1 // pred_check
      _
    $region3: #{tpu_custom_call.1} parent=1 // pred_check_branch
      %12 = sbr.rel (0) target = $region5
    $region4: #{tpu_custom_call.1} parent=1 // pred_region
      %s14 = ssub.s32 128, 128
      %15 = vsyncadd [#allocation3], %s14
      %s17 = sshll.u32 [#allocation2], 4
      %s18 = int_to_ptr.vmem [resolvable:$true] %s17
      %20 = dma.hbm_to_vmem [thread:$0]  %s0, 128, %s18, [#allocation3]
    $region5: #{tpu_custom_call.1} parent=1 // pred_fallthru
      _
    // Predicated region
    $region6: #{tpu_custom_call.1} parent=1 // pred_check
      _
    $region7: #{tpu_custom_call.1} parent=1 // pred_check_branch
      %22 = sbr.rel (0) target = $region9
    $region8: #{tpu_custom_call.1} parent=1 // pred_region
      %s24 = ssub.s32 128, 128
      %25 = vsyncadd [#allocation6], %s24
      %s27 = sshll.u32 [#allocation5], 4
      %s28 = int_to_ptr.vmem [resolvable:$true] %s27
      %30 = dma.hbm_to_vmem [thread:$0]  %s1, 128, %s28, [#allocation6]
    $region9: #{tpu_custom_call.1} parent=1 // pred_fallthru
      _
    // Predicated region
    $region10: #{tpu_custom_call.1} parent=1 // pred_check
      _
    $region11: #{tpu_custom_call.1} parent=1 // pred_check_branch
      %32 = sbr.rel (0) target = $region13
    $region12: #{tpu_custom_call.1} parent=1 // pred_region
      %s34 = ssub.s32 1024, 1024
      %35 = vsyncadd [#allocation6], %s34
      %s36 = sshll.u32 [#allocation7], 4
      %s37 = int_to_ptr.vmem [resolvable:$true] %s36
      %42 = dma.hbm_to_vmem [thread:$0]  %s2, 1024, %s37, [#allocation6], 64, 64, 4
    $region13: #{tpu_custom_call.1} parent=1 // pred_fallthru
      _
    // Predicated region
    $region14: #{tpu_custom_call.1} parent=1 // pred_check
      _
    $region15: #{tpu_custom_call.1} parent=1 // pred_check_branch
      %44 = sbr.rel (0) target = $region17
    $region16: #{tpu_custom_call.1} parent=1 // pred_region
      %45 = dma.done [#allocation3], 128
    $region17: #{tpu_custom_call.1} parent=1 // pred_fallthru
      _
    // Predicated region
    $region18: #{tpu_custom_call.1} parent=1 // pred_check
      _
    $region19: #{tpu_custom_call.1} parent=1 // pred_check_branch
      %47 = sbr.rel (0) target = $region21
    $region20: #{tpu_custom_call.1} parent=1 // pred_region
      %48 = dma.done [#allocation6], 128
    $region21: #{tpu_custom_call.1} parent=1 // pred_fallthru
      _
    // Predicated region
    $region22: #{tpu_custom_call.1} parent=1 // pred_check
      _
    $region23: #{tpu_custom_call.1} parent=1 // pred_check_branch
      %50 = sbr.rel (0) target = $region25
    $region24: #{tpu_custom_call.1} parent=1 // pred_region
      %51 = dma.done [#allocation6], 1024
    $region25: #{tpu_custom_call.1} parent=1 // pred_fallthru
      _
    %v53 = vld [vmem:[#allocation2] sm:$0xff]
    %v54 = vld [vmem:[#allocation5] sm:$0xff]
    %v55 = vadd.f32 %v53, %v54
    %v56 = vxor.u32 %v55, 2147483648
    %v57 = vmul.f32 %v56, 1.442695
    %v58 = vpow.pop %v57
    %v59 = vadd.f32 %v58, 1.0
    %v60 = vrcp.pop %v59
    %v61 = vmul.f32 1.0, %v60
    %v62 = vmul.f32 %v55, %v61
    %v63 = vpack.c.bf16 %v62, %v62
    %v64 = vld [vmem:[#allocation7] sm:$0xf]
    %v65 = vld [vmem:[#allocation7 + $0x4] sm:$0xf]
    %v66 = vld [vmem:[#allocation7 + $0x8] sm:$0xf]
    %v67 = vld [vmem:[#allocation7 + $0xc] sm:$0xf]
    %v68 = vld [vmem:[#allocation7 + $0x10] sm:$0xf]
    %v69 = vld [vmem:[#allocation7 + $0x14] sm:$0xf]
    %v70 = vld [vmem:[#allocation7 + $0x18] sm:$0xf]
    %v71 = vld [vmem:[#allocation7 + $0x1c] sm:$0xf]
    %v72 = vld [vmem:[#allocation7 + $0x20] sm:$0xf]
    %v73 = vld [vmem:[#allocation7 + $0x24] sm:$0xf]
    %v74 = vld [vmem:[#allocation7 + $0x28] sm:$0xf]
    %v75 = vld [vmem:[#allocation7 + $0x2c] sm:$0xf]
    %v76 = vld [vmem:[#allocation7 + $0x30] sm:$0xf]
    %v77 = vld [vmem:[#allocation7 + $0x34] sm:$0xf]
    %v78 = vld [vmem:[#allocation7 + $0x38] sm:$0xf]
    %v79 = vld [vmem:[#allocation7 + $0x3c] sm:$0xf]
    %v96 = vunpack.c.l.b16 %v64
    %v97 = vunpack.c.l.b16 %v65
    %v98 = vunpack.c.l.b16 %v66
    %v99 = vunpack.c.l.b16 %v67
    %v100 = vunpack.c.l.b16 %v68
    %v101 = vunpack.c.l.b16 %v69
    %v102 = vunpack.c.l.b16 %v70
    %v103 = vunpack.c.l.b16 %v71
    %v104 = vunpack.c.l.b16 %v72
    %v105 = vunpack.c.l.b16 %v73
    %v106 = vunpack.c.l.b16 %v74
    %v107 = vunpack.c.l.b16 %v75
    %v108 = vunpack.c.l.b16 %v76
    %v109 = vunpack.c.l.b16 %v77
    %v110 = vunpack.c.l.b16 %v78
    %v111 = vunpack.c.l.b16 %v79
    %v112 = vpack.c.b16 %v97, %v96
    %v113 = vpack.c.b16 %v99, %v98
    %v114 = vpack.c.b16 %v101, %v100
    %v115 = vpack.c.b16 %v103, %v102
    %v116 = vpack.c.b16 %v105, %v104
    %v117 = vpack.c.b16 %v107, %v106
    %v118 = vpack.c.b16 %v109, %v108
    %v119 = vpack.c.b16 %v111, %v110
    %128 = vmatprep.subr.bf16.mxu0 0
    %129 = vmatpush1.bf16.msra.mxu0 %v112
    %130 = vmatprep.subr.bf16.mxu0 0
    %131 = vmatpush1.bf16.msra.mxu0 %v113
    %132 = vmatprep.subr.bf16.mxu0 0
    %133 = vmatpush1.bf16.msra.mxu0 %v114
    %134 = vmatprep.subr.bf16.mxu0 0
    %135 = vmatpush1.bf16.msra.mxu0 %v115
    %136 = vmatprep.subr.bf16.mxu0 0
    %137 = vmatpush1.bf16.msra.mxu0 %v116
    %138 = vmatprep.subr.bf16.mxu0 0
    %139 = vmatpush1.bf16.msra.mxu0 %v117
    %140 = vmatprep.subr.bf16.mxu0 0
    %141 = vmatpush1.bf16.msra.mxu0 %v118
    %142 = vmatprep.subr.bf16.mxu0 0
    %143 = vmatpush1.bf16.msra.mxu0 %v119
    %144 = vmatprep.subr.bf16.mxu0 0
    %145 = vmatpush1.bf16.msra.mxu0 0
    %146 = vmatprep.subr.bf16.mxu0 0
    %147 = vmatpush1.bf16.msra.mxu0 0
    %148 = vmatprep.subr.bf16.mxu0 0
    %149 = vmatpush1.bf16.msra.mxu0 0
    %150 = vmatprep.subr.bf16.mxu0 0
    %151 = vmatpush1.bf16.msra.mxu0 0
    %152 = vmatprep.subr.bf16.mxu0 0
    %153 = vmatpush1.bf16.msra.mxu0 0
    %154 = vmatprep.subr.bf16.mxu0 0
    %155 = vmatpush1.bf16.msra.mxu0 0
    %156 = vmatprep.subr.bf16.mxu0 0
    %157 = vmatpush1.bf16.msra.mxu0 0
    %158 = vmatprep.subr.bf16.mxu0 0
    %159 = vmatpush1.bf16.msra.mxu0 0
    %160 = vmatprep.mubr.bf16.mxu0 0
    %161 = vmatmul.mubr.bf16.gmra.mrb[0].mxu0 %v63
    %v162 = vpop.f32.mrb[0].mxu0
    %v163 = vadd.f32 0.0, %v162
    %v164 = vpop.f32.mrb[0].mxu0
    %v165 = vpop.f32.mrb[0].mxu0
    %v166 = vpop.f32.mrb[0].mxu0
    %167 = vdwg.mxu0
    %168 = vst [vmem:[#allocation8] sm:$0xff] %v163
    // Predicated region
    $region26: #{tpu_custom_call.1} parent=1 // pred_check
      _
    $region27: #{tpu_custom_call.1} parent=1 // pred_check_branch
      %170 = sbr.rel (0) target = $region29
    $region28: #{tpu_custom_call.1} parent=1 // pred_region
      %s172 = ssub.s32 128, 128
      %173 = vsyncadd [#allocation4], %s172
      %s175 = sshll.u32 [#allocation8], 4
      %s176 = int_to_ptr.vmem [resolvable:$true] %s175
      %178 = dma.vmem_to_hbm [thread:$0]  %s176, 128, %s3, [#allocation4]
    $region29: #{tpu_custom_call.1} parent=1 // pred_fallthru
      _
    // Predicated region
    $region30: #{tpu_custom_call.1} parent=1 // pred_check
      _
    $region31: #{tpu_custom_call.1} parent=1 // pred_check_branch
      %180 = sbr.rel (0) target = $region33
    $region32: #{tpu_custom_call.1} parent=1 // pred_region
      %181 = dma.done [#allocation4], 128
    $region33: #{tpu_custom_call.1} parent=1 // pred_fallthru
      _
    %182 = vsyncpa [#allocation3], 1
    %183 = vsyncpa [#allocation6], 1
    %184 = vsyncpa [#allocation4], 1

</llo_original>
